<compile_context>
chip_gen: v7x
topology: tpu7x:2x2x1
jax: 0.10.0
libtpu: 0.0.40
codegen_flags: <defaults>
</compile_context>

<pallas_src>
import math

import jax
import jax.numpy as jnp
from jax import lax
from jax.experimental import pallas as pl
from jax.experimental.pallas import tpu as pltpu


_LANE = 128
_VMEM_BUDGET_BYTES = 40 << 20   # conservative: fits v7x's 64 MiB/TC with headroom


def _round_up(x, m):
    return ((x + m - 1) // m) * m


def mlb_att_kernel(xv_ref, xq_ref, w_ref, b_ref, o_ref):
    # xv_ref: (tb, dim_q)        x_v tile
    # xq_ref: (tb, dim_h_p)      x_q tile (lane-dense)
    # w_ref : (dim_h_p, dim_q)   PyTorch-layout weight, grid-invariant
    # b_ref : (1, dim_h_p)       f32 bias, grid-invariant
    # o_ref : (tb, dim_h_p)
    fused = lax.dot_general(
        xv_ref[...], w_ref[...],
        dimension_numbers=(((1,), (1,)), ((), ())),   # contract last dims ("trans_b")
        preferred_element_type=jnp.float32,           # f32 MXU accumulation
    )
    fused = fused + b_ref[...]                        # bias already f32
    o_ref[...] = (fused * xq_ref[...].astype(jnp.float32)).astype(o_ref.dtype)


def _est_vmem_bytes(tb, dim_q, dim_h_p, x_itemsize, w_itemsize):
    # Streaming tiles are double-buffered by the Pallas pipeline; count the
    # grid-invariant weight/bias at 2x as well (conservative estimate).
    stream = 2 * tb * dim_q * x_itemsize          # x_v
    stream += 2 * tb * dim_h_p * x_itemsize       # x_q
    stream += 2 * tb * dim_h_p * x_itemsize       # out
    resident = 2 * dim_h_p * dim_q * w_itemsize   # weight
    resident += 2 * dim_h_p * 4                   # f32 bias
    return stream + resident


def mlb_att(x_v, x_q, weight, bias, *, tb=512):
    """MLBAtt forward: (x_v @ weight.T + bias) * x_q.

    x_v: (B, dim_q), x_q: (B, dim_h),
    weight: (dim_h, dim_q)  [PyTorch nn.Linear layout],  bias: (dim_h,).
    """
    B, dim_q = x_v.shape
    dim_h, dim_q_w = weight.shape
    assert dim_q_w == dim_q
    assert x_q.shape == (B, dim_h)
    assert bias.shape == (dim_h,)

    x_itemsize = jnp.dtype(x_v.dtype).itemsize
    w_itemsize = jnp.dtype(weight.dtype).itemsize

    # --- tile sizing --------------------------------------------------------
    dim_h_p = _round_up(dim_h, _LANE)              # lane-dense output last dim
    sub = max(8, 32 // x_itemsize)                 # 8 for f32, 16 for bf16, 32 for 8-bit
    tb_eff = min(tb, _round_up(B, sub))
    tb_eff = _round_up(tb_eff, sub)
    # Clamp the batch tile against the VMEM budget (matters on v7x / huge dims).
    while tb_eff > sub and _est_vmem_bytes(tb_eff, dim_q, dim_h_p,
                                           x_itemsize, w_itemsize) > _VMEM_BUDGET_BYTES:
        tb_eff = max(sub, _round_up(tb_eff // 2, sub))
    B_p = _round_up(B, tb_eff)
    grid = (B_p // tb_eff,)

    # --- wrapper-side layout plumbing (zero padding; padded rows/cols produce
    # exact zeros and are sliced off below, so numerics are unchanged) --------
    if B_p != B:
        x_v = jnp.pad(x_v, ((0, B_p - B), (0, 0)))
    if B_p != B or dim_h_p != dim_h:
        x_q = jnp.pad(x_q, ((0, B_p - B), (0, dim_h_p - dim_h)))
    if dim_h_p != dim_h:
        weight = jnp.pad(weight, ((0, dim_h_p - dim_h), (0, 0)))
    b2d = bias.astype(jnp.float32)                 # cast once, not per grid step
    if dim_h_p != dim_h:
        b2d = jnp.pad(b2d, (0, dim_h_p - dim_h))
    b2d = b2d.reshape(1, dim_h_p)

    needed = _est_vmem_bytes(tb_eff, dim_q, dim_h_p, x_itemsize, w_itemsize)
    vmem_limit = int(min(max(needed * 5 // 4 + (2 << 20), 32 << 20), 64 << 20))

    # NOTE(perf): the weight/bias index_maps are constant so the pipeline does
    # not re-fetch them every step.  On VMEM-tight configs (v7x + production
    # dim_h) add `pipeline_mode=pl.Buffered(1)` to the two param BlockSpecs to
    # drop their second buffer; at these demo sizes it saves <100 KiB.
    out = pl.pallas_call(
        mlb_att_kernel,
        out_shape=jax.ShapeDtypeStruct((B_p, dim_h_p), x_v.dtype),
        grid_spec=pltpu.PrefetchScalarGridSpec(
            num_scalar_prefetch=0,
            grid=grid,
            in_specs=[
                pl.BlockSpec((tb_eff, dim_q), lambda i: (i, 0)),    # x_v tile
                pl.BlockSpec((tb_eff, dim_h_p), lambda i: (i, 0)),  # x_q tile
                pl.BlockSpec((dim_h_p, dim_q), lambda i: (0, 0)),   # weight (resident)
                pl.BlockSpec((1, dim_h_p), lambda i: (0, 0)),       # f32 bias (resident)
            ],
            out_specs=pl.BlockSpec((tb_eff, dim_h_p), lambda i: (i, 0)),
        ),
        compiler_params=pltpu.CompilerParams(
            dimension_semantics=("parallel",),   # shard batch across TCs on v7x
            vmem_limit_bytes=vmem_limit,
        ),
    )(x_v, x_q, weight, b2d)

    return out[:B, :dim_h]


if __name__ == "__main__":
    key = jax.random.PRNGKey(0)

    # ---- f32 check: small, deliberately unaligned shapes (exercise both the
    # batch-padding and the lane-padding paths).
    B, dim_q, dim_h = 20, 32, 96
    k_xv, k_xq, k_w, k_b = jax.random.split(key, 4)
    x_v = jax.random.normal(k_xv, (B, dim_q), dtype=jnp.float32)
    x_q = jax.random.normal(k_xq, (B, dim_h), dtype=jnp.float32)
    bound = 1.0 / math.sqrt(dim_q)
    weight = jax.random.uniform(k_w, (dim_h, dim_q), minval=-bound, maxval=bound,
                                dtype=jnp.float32)
    bias = jax.random.uniform(k_b, (dim_h,), minval=-bound, maxval=bound,
                              dtype=jnp.float32)

    out = jax.block_until_ready(mlb_att(x_v, x_q, weight, bias))
    ref = (x_v @ weight.T + bias) * x_q
    assert out.shape == (B, dim_h)
    assert jnp.allclose(out, ref, atol=1e-4, rtol=1e-4), "f32 mismatch vs reference"

    # ---- bf16 check (the v6e/v7x bandwidth path): aligned small shapes.
    B2, dq2, dh2 = 32, 32, 128
    k_xv2, k_xq2, k_w2, k_b2 = jax.random.split(jax.random.PRNGKey(0), 4)
    x_v2 = jax.random.normal(k_xv2, (B2, dq2), dtype=jnp.float32).astype(jnp.bfloat16)
    x_q2 = jax.random.normal(k_xq2, (B2, dh2), dtype=jnp.float32).astype(jnp.bfloat16)
    w2 = jax.random.uniform(k_w2, (dh2, dq2), minval=-bound, maxval=bound,
                            dtype=jnp.float32).astype(jnp.bfloat16)
    b2 = jax.random.uniform(k_b2, (dh2,), minval=-bound, maxval=bound,
                            dtype=jnp.float32)
    out2 = jax.block_until_ready(mlb_att(x_v2, x_q2, w2, b2))
    ref2 = ((x_v2.astype(jnp.float32) @ w2.astype(jnp.float32).T + b2)
            * x_q2.astype(jnp.float32))
    assert out2.shape == (B2, dh2) and out2.dtype == jnp.bfloat16
    assert jnp.allclose(out2.astype(jnp.float32), ref2, atol=5e-2, rtol=5e-2), \
        "bf16 mismatch vs reference"

    print("KERNEL_OK")
</pallas_src>

<mosaic_0001>
module attributes {stable_mosaic.version = 11 : i64} {
  func.func @mlb_att_kernel(%arg0: i32, %arg1: memref<24x32xf32, #tpu.memory_space<vmem>>, %arg2: memref<24x128xf32, #tpu.memory_space<vmem>>, %arg3: memref<128x32xf32, #tpu.memory_space<vmem>>, %arg4: memref<1x128xf32, #tpu.memory_space<vmem>>, %arg5: memref<24x128xf32, #tpu.memory_space<vmem>>) attributes {dimension_semantics = [#tpu.dimension_semantics<parallel>], iteration_bounds = array<i64: 1>, scalar_prefetch = 0 : i64, scratch_operands = 0 : i64, tpu.core_type = #tpu.core_type<tc>, window_params = [{transform_indices = @transform_0, window_bounds = array<i64: 24, 32>}, {transform_indices = @transform_1, window_bounds = array<i64: 24, 128>}, {pipeline_mode = #tpu.pipeline_mode<synchronous>, transform_indices = @transform_2, window_bounds = array<i64: 128, 32>}, {pipeline_mode = #tpu.pipeline_mode<synchronous>, transform_indices = @transform_3, window_bounds = array<i64: 1, 128>}, {transform_indices = @transform_4, window_bounds = array<i64: 24, 128>}]} {
    %c0 = arith.constant 0 : index
    %c0_0 = arith.constant 0 : index
    %0 = vector.load %arg1[%c0, %c0_0] : memref<24x32xf32, #tpu.memory_space<vmem>>, vector<24x32xf32>
    %c0_1 = arith.constant 0 : index
    %c0_2 = arith.constant 0 : index
    %1 = vector.load %arg3[%c0_1, %c0_2] : memref<128x32xf32, #tpu.memory_space<vmem>>, vector<128x32xf32>
    %cst = arith.constant dense<0.000000e+00> : vector<24x128xf32>
    %2 = tpu.matmul %0, %1, %cst {dimension_numbers = #tpu.dot_dimension_numbers<[1], [1], [0], [0], [0, 0, 1, 0], [], []>} : vector<24x32xf32>, vector<128x32xf32>, vector<24x128xf32> -> vector<24x128xf32>
    %c0_3 = arith.constant 0 : index
    %c0_4 = arith.constant 0 : index
    %3 = vector.load %arg4[%c0_3, %c0_4] : memref<1x128xf32, #tpu.memory_space<vmem>>, vector<1x128xf32>
    %4 = vector.broadcast %3 : vector<1x128xf32> to vector<24x128xf32>
    %5 = arith.addf %2, %4 : vector<24x128xf32>
    %c0_5 = arith.constant 0 : index
    %c0_6 = arith.constant 0 : index
    %6 = vector.load %arg2[%c0_5, %c0_6] : memref<24x128xf32, #tpu.memory_space<vmem>>, vector<24x128xf32>
    %7 = arith.mulf %5, %6 : vector<24x128xf32>
    %c0_7 = arith.constant 0 : index
    %c0_8 = arith.constant 0 : index
    %8 = vector.load %arg5[%c0_7, %c0_8] : memref<24x128xf32, #tpu.memory_space<vmem>>, vector<24x128xf32>
    tpu.vector_store %arg5[%c0_7, %c0_8], %7 {strides = array<i32>} : memref<24x128xf32, #tpu.memory_space<vmem>>, vector<24x128xf32>,
    return
  }
  func.func @transform_0(%arg0: i32) -> (i32, i32) {
    %c0_i32 = arith.constant 0 : i32
    %c0_i32_0 = arith.constant 0 : i32
    return %arg0, %c0_i32 : i32, i32
  }
  func.func @transform_1(%arg0: i32) -> (i32, i32) {
    %c0_i32 = arith.constant 0 : i32
    %c0_i32_0 = arith.constant 0 : i32
    return %arg0, %c0_i32 : i32, i32
  }
  func.func @transform_2(%arg0: i32) -> (i32, i32) {
    %c0_i32 = arith.constant 0 : i32
    %c0_i32_0 = arith.constant 0 : i32
    %c0_i32_1 = arith.constant 0 : i32
    return %c0_i32, %c0_i32_0 : i32, i32
  }
  func.func @transform_3(%arg0: i32) -> (i32, i32) {
    %c0_i32 = arith.constant 0 : i32
    %c0_i32_0 = arith.constant 0 : i32
    %c0_i32_1 = arith.constant 0 : i32
    return %c0_i32, %c0_i32_0 : i32, i32
  }
  func.func @transform_4(%arg0: i32) -> (i32, i32) {
    %c0_i32 = arith.constant 0 : i32
    %c0_i32_0 = arith.constant 0 : i32
    return %arg0, %c0_i32 : i32, i32
  }
}

</mosaic_0001>

<llo_original>
// kernel: tpu_custom_call.1
$region0: #{tpu_custom_call.1}
  #allocation0 [shape = 'u32[]', space=smem, size = 0x4, offset = 0x4, fixed_abs, tag = 'smem constant byte address 0x4 - core index']
  #allocation1 [shape = 'u32[144,128]{1,0:T(1,128)}', space=vmem, size = 0x12000, scoped, tag = 'internal scratch']
  %s0 = inlined_call_operand.vmem [shape: f32[24,32], index: 0, kind: input, shape index: {}]
  %s1 = inlined_call_operand.vmem [shape: f32[24,128], index: 1, kind: input, shape index: {}]
  %s2 = inlined_call_operand.vmem [shape: f32[128,32], index: 2, kind: input, shape index: {}]
  %s3 = inlined_call_operand.vmem [shape: f32[1,128], index: 3, kind: input, shape index: {}]
  %s4 = inlined_call_operand.hbm [shape: f32[24,128], index: 4, kind: output, shape index: {}]
  %s5 = sld [smem:[#allocation0]]
  $region26: #{tpu_custom_call.1} parent=0
    _
  %s7 = ssub.s32 1, %s5
  %s8 = scalar_select 0, %s7, %s5
  $region1: #{tpu_custom_call.1} parent=0
    #allocation2 [shape = 'u8[12288]{0}', space=vmem, size = 0x3000, scoped, tag = 'output window, operand 0, single buffered']
    #allocation3 [shape = 's32[1]{0}', space=sflag, size = 0x4, scoped, tag = 'scoped memory for tpu_custom_call.1']
    %9 = vsyncpa [#allocation3], 0
    // Predicated region
    $region2: #{tpu_custom_call.1} parent=1 // pred_check
      _
    $region3: #{tpu_custom_call.1} parent=1 // pred_check_branch
      %11 = sbr.rel (0) target = $region5
    $region4: #{tpu_custom_call.1} parent=1 // pred_region
      _
    $region5: #{tpu_custom_call.1} parent=1 // pred_fallthru
      _
    // Predicated region
    $region6: #{tpu_custom_call.1} parent=1 // pred_check
      _
    $region7: #{tpu_custom_call.1} parent=1 // pred_check_branch
      %13 = sbr.rel (0) target = $region9
    $region8: #{tpu_custom_call.1} parent=1 // pred_region
      _
    $region9: #{tpu_custom_call.1} parent=1 // pred_fallthru
      _
    // Predicated region
    $region10: #{tpu_custom_call.1} parent=1 // pred_check
      _
    $region11: #{tpu_custom_call.1} parent=1 // pred_check_branch
      %15 = sbr.rel (0) target = $region13
    $region12: #{tpu_custom_call.1} parent=1 // pred_region
      _
    $region13: #{tpu_custom_call.1} parent=1 // pred_fallthru
      _
    // Predicated region
    $region14: #{tpu_custom_call.1} parent=1 // pred_check
      _
    $region15: #{tpu_custom_call.1} parent=1 // pred_check_branch
      %17 = sbr.rel (0) target = $region17
    $region16: #{tpu_custom_call.1} parent=1 // pred_region
      _
    $region17: #{tpu_custom_call.1} parent=1 // pred_fallthru
      _
    %v18 = vld [vmem:[%s0] sm:$0xff]
    %v19 = vld [vmem:[%s0 + $0x8] sm:$0xff]
    %v20 = vld [vmem:[%s0 + $0x10] sm:$0xff]
    %v21 = vld [vmem:[%s2] sm:$0xff]
    %v22 = vld [vmem:[%s2 + $0x8] sm:$0xff]
    %v23 = vld [vmem:[%s2 + $0x10] sm:$0xff]
    %v24 = vld [vmem:[%s2 + $0x18] sm:$0xff]
    %v25 = vld [vmem:[%s2 + $0x20] sm:$0xff]
    %v26 = vld [vmem:[%s2 + $0x28] sm:$0xff]
    %v27 = vld [vmem:[%s2 + $0x30] sm:$0xff]
    %v28 = vld [vmem:[%s2 + $0x38] sm:$0xff]
    %v29 = vld [vmem:[%s2 + $0x40] sm:$0xff]
    %v30 = vld [vmem:[%s2 + $0x48] sm:$0xff]
    %v31 = vld [vmem:[%s2 + $0x50] sm:$0xff]
    %v32 = vld [vmem:[%s2 + $0x58] sm:$0xff]
    %v33 = vld [vmem:[%s2 + $0x60] sm:$0xff]
    %v34 = vld [vmem:[%s2 + $0x68] sm:$0xff]
    %v35 = vld [vmem:[%s2 + $0x70] sm:$0xff]
    %v36 = vld [vmem:[%s2 + $0x78] sm:$0xff]
    %v37 = vld [vmem:[%s3] sm:$0x1]
    %v39 = vlaneseq
    %v40 = vshrl.u32 %v39, 7
    %v41 = vsub.s32 0, %v40
    %v42 = vrot.slane %v37, %v41
    %vm44 = vcmask 261120
    %v46 = vsel %vm44, %v18, 0
    %v49 = vsel %vm44, %v19, 0
    %v52 = vsel %vm44, %v20, 0
    %v55 = vsel %vm44, %v21, 0
    %v58 = vsel %vm44, %v22, 0
    %v61 = vsel %vm44, %v23, 0
    %v64 = vsel %vm44, %v24, 0
    %v67 = vsel %vm44, %v25, 0
    %v70 = vsel %vm44, %v26, 0
    %v73 = vsel %vm44, %v27, 0
    %v76 = vsel %vm44, %v28, 0
    %v79 = vsel %vm44, %v29, 0
    %v82 = vsel %vm44, %v30, 0
    %v85 = vsel %vm44, %v31, 0
    %v88 = vsel %vm44, %v32, 0
    %v91 = vsel %vm44, %v33, 0
    %v94 = vsel %vm44, %v34, 0
    %v97 = vsel %vm44, %v35, 0
    %v100 = vsel %vm44, %v36, 0
    %102 = vmatprep.subr.mxu0 0.0
    %103 = vmatpush1.xpose.msra.mxu0 %v55
    %104 = vmatprep.subr.mxu0 0.0
    %105 = vmatpush1.xpose.msra.mxu0 %v58
    %106 = vmatprep.subr.mxu0 0.0
    %107 = vmatpush1.xpose.msra.mxu0 %v61
    %108 = vmatprep.subr.mxu0 0.0
    %109 = vmatpush1.xpose.msra.mxu0 %v64
    %110 = vmatprep.subr.mxu0 0.0
    %111 = vmatpush1.xpose.msra.mxu0 %v67
    %112 = vmatprep.subr.mxu0 0.0
    %113 = vmatpush1.xpose.msra.mxu0 %v70
    %114 = vmatprep.subr.mxu0 0.0
    %115 = vmatpush1.xpose.msra.mxu0 %v73
    %116 = vmatprep.subr.mxu0 0.0
    %117 = vmatpush1.xpose.msra.mxu0 %v76
    %118 = vmatprep.subr.mxu0 0.0
    %119 = vmatpush1.xpose.msra.mxu0 %v79
    %120 = vmatprep.subr.mxu0 0.0
    %121 = vmatpush1.xpose.msra.mxu0 %v82
    %122 = vmatprep.subr.mxu0 0.0
    %123 = vmatpush1.xpose.msra.mxu0 %v85
    %124 = vmatprep.subr.mxu0 0.0
    %125 = vmatpush1.xpose.msra.mxu0 %v88
    %126 = vmatprep.subr.mxu0 0.0
    %127 = vmatpush1.xpose.msra.mxu0 %v91
    %128 = vmatprep.subr.mxu0 0.0
    %129 = vmatpush1.xpose.msra.mxu0 %v94
    %130 = vmatprep.subr.mxu0 0.0
    %131 = vmatpush1.xpose.msra.mxu0 %v97
    %132 = vmatprep.subr.mxu0 0.0
    %133 = vmatpush1.xpose.msra.mxu0 %v100
    %134 = vmatprep.subr.mxu0 0.0
    %135 = vmatpush1.xpose.msra.mxu0 0.0
    %136 = vmatprep.subr.mxu0 0.0
    %137 = vmatpush1.xpose.msra.mxu0 0.0
    %138 = vmatprep.subr.mxu0 0.0
    %139 = vmatpush1.xpose.msra.mxu0 0.0
    %140 = vmatprep.subr.mxu0 0.0
    %141 = vmatpush1.xpose.msra.mxu0 0.0
    %142 = vmatprep.subr.mxu0 0.0
    %143 = vmatpush1.xpose.msra.mxu0 0.0
    %144 = vmatprep.subr.mxu0 0.0
    %145 = vmatpush1.xpose.msra.mxu0 0.0
    %146 = vmatprep.subr.mxu0 0.0
    %147 = vmatpush1.xpose.msra.mxu0 0.0
    %148 = vmatprep.subr.mxu0 0.0
    %149 = vmatpush1.xpose.msra.mxu0 0.0
    %150 = vmatprep.subr.mxu0 0.0
    %151 = vmatpush1.xpose.msra.mxu0 0.0
    %152 = vmatprep.subr.mxu0 0.0
    %153 = vmatpush1.xpose.msra.mxu0 0.0
    %154 = vmatprep.subr.mxu0 0.0
    %155 = vmatpush1.xpose.msra.mxu0 0.0
    %156 = vmatprep.subr.mxu0 0.0
    %157 = vmatpush1.xpose.msra.mxu0 0.0
    %158 = vmatprep.subr.mxu0 0.0
    %159 = vmatpush1.xpose.msra.mxu0 0.0
    %160 = vmatprep.subr.mxu0 0.0
    %161 = vmatpush1.xpose.msra.mxu0 0.0
    %162 = vmatprep.subr.mxu0 0.0
    %163 = vmatpush1.xpose.msra.mxu0 0.0
    %164 = vmatprep.subr.mxu0 0.0
    %165 = vmatpush1.xpose.msra.mxu0 0.0
    %166 = vmatprep.mubr.f32.mxu0 0.0
    %167 = vmatmul.mubr.f32.gmra.mrb[0].mxu0 %v46
    %v168 = vpop.f32.mrb[0].mxu0
    %v169 = vadd.f32 %v42, %v168
    %v170 = vpop.f32.mrb[0].mxu0
    %171 = vmatprep.mubr.f32.mxu0 0.0
    %172 = vmatmul.mubr.f32.gmra.mrb[0].mxu0 %v49
    %v173 = vpop.f32.mrb[0].mxu0
    %v174 = vadd.f32 %v42, %v173
    %v175 = vpop.f32.mrb[0].mxu0
    %176 = vmatprep.mubr.f32.mxu0 0.0
    %177 = vmatmul.mubr.f32.gmra.mrb[0].mxu0 %v52
    %v178 = vpop.f32.mrb[0].mxu0
    %v179 = vadd.f32 %v42, %v178
    %v180 = vpop.f32.mrb[0].mxu0
    %181 = vdwg.mxu0
    %v182 = vld [vmem:[%s1] sm:$0xff]
    %v183 = vld [vmem:[%s1 + $0x8] sm:$0xff]
    %v184 = vld [vmem:[%s1 + $0x10] sm:$0xff]
    %v185 = vmul.f32 %v169, %v182
    %v186 = vmul.f32 %v174, %v183
    %v187 = vmul.f32 %v179, %v184
    %188 = vst [vmem:[#allocation2] sm:$0xff] %v185
    %189 = vst [vmem:[#allocation2 + $0x8] sm:$0xff] %v186
    %190 = vst [vmem:[#allocation2 + $0x10] sm:$0xff] %v187
    // Predicated region
    $region18: #{tpu_custom_call.1} parent=1 // pred_check
      _
    $region19: #{tpu_custom_call.1} parent=1 // pred_check_branch
      %192 = sbr.rel (0) target = $region21
    $region20: #{tpu_custom_call.1} parent=1 // pred_region
      %s194 = ssub.s32 384, 384
      %195 = vsyncadd [#allocation3], %s194
      %s196 = sshll.u32 [#allocation2], 4
      %s197 = int_to_ptr.vmem [resolvable:$true] %s196
      %202 = dma.vmem_to_hbm [thread:$0]  %s197, 384, %s4, [#allocation3], 128, 128, 8
    $region21: #{tpu_custom_call.1} parent=1 // pred_fallthru
      _
    // Predicated region
    $region22: #{tpu_custom_call.1} parent=1 // pred_check
      _
    $region23: #{tpu_custom_call.1} parent=1 // pred_check_branch
      %204 = sbr.rel (0) target = $region25
    $region24: #{tpu_custom_call.1} parent=1 // pred_region
      %205 = dma.done [#allocation3], 384
    $region25: #{tpu_custom_call.1} parent=1 // pred_fallthru
      _
    %206 = vsyncpa [#allocation3], 1

</llo_original>
